<compile_context>
chip_gen: v6e
topology: v6e:2x2x1
jax: 0.10.0
libtpu: 0.0.40
codegen_flags: <defaults>
</compile_context>

<pallas_src>
import functools

import jax
import jax.numpy as jnp
from jax.experimental import pallas as pl
from jax.experimental.pallas import tpu as pltpu

LANE = 128      # lane width (last dim)
SUBLANE = 8     # sublane width (second-to-last dim)


def _round_up(x: int, m: int) -> int:
    return ((x + m - 1) // m) * m


# ----------------------------------------------------------------------------
# Fused Pallas kernel: whole MLP (all layers) for one batch tile.
# ----------------------------------------------------------------------------
def _fused_mlp_kernel(*refs, nlayers: int):
    """refs (all VMEM):
      x_ref      : (TB, size_s)              f32   input tile (unpadded K)
      w0_ref     : (size_s, F_pad)           bf16  layer-0 weight (N padded)
      wstack_ref : (nlayers-1, F_pad, F_pad) bf16  layers 1.. weights (if n>1)
      b_ref      : (nlayers, 1, F_pad)       f32   all biases
      o_ref      : (TB, F_pad)               f32   output tile
    """
    if nlayers > 1:
        x_ref, w0_ref, wstack_ref, b_ref, o_ref = refs
    else:
        x_ref, w0_ref, b_ref, o_ref = refs
        wstack_ref = None

    h = x_ref[...]
    for i in range(nlayers):  # unrolled at trace time
        w = w0_ref[...] if i == 0 else wstack_ref[i - 1]
        # bf16 MXU inputs, f32 accumulation; bias add + activation in f32.
        y = jnp.dot(h.astype(jnp.bfloat16), w, preferred_element_type=jnp.float32)
        y = y + b_ref[i]
        h = jnp.tanh(y) if i == nlayers - 1 else jnp.maximum(y, 0.0)
    o_ref[...] = h.astype(o_ref.dtype)


# ----------------------------------------------------------------------------
# Parameter construction mirroring DDP.__init__ (deterministic, in-script).
# ----------------------------------------------------------------------------
def init_ddp_params(key, size_s: int, size_a: int, nlayers: int, layer_width: int):
    """Build [(W, b), ...] with PyTorch nn.Linear-style uniform init."""
    assert nlayers >= 1
    params = []
    for i in range(nlayers):
        size_in = size_s if i == 0 else layer_width
        size_out = size_a if i == nlayers - 1 else layer_width
        key, kw, kb = jax.random.split(key, 3)
        bound = 1.0 / float(size_in) ** 0.5
        # Stored as [in, out] (transpose of torch's [out, in]).
        w = jax.random.uniform(kw, (size_in, size_out), jnp.float32, -bound, bound)
        b = jax.random.uniform(kb, (size_out,), jnp.float32, -bound, bound)
        params.append((w, b))
    return params


def prepare_packed_params(params, size_s: int, size_a: int, layer_width: int):
    """Pack params for the fused kernel (done ONCE, amortized over calls).

    Padding invariants (correctness depends on these staying true):
      * All layer OUTPUT dims and hidden INPUT dims are zero-padded to a common
        F_pad = round_up(max(layer_width, size_a), 128) so layers 1.. stack.
      * Layer 0 keeps its REAL input dim (size_s): x is passed unpadded, so no
        zero-K padding of x is needed anywhere.
      * Zero padding is exact: padded weight columns + zero bias give zero
        activations; ReLU(0)=0 / tanh(0)=0 and zero rows in the next weight
        leave real lanes untouched; padded output lanes are sliced off.

    Returns (w0_bf16, w_stack_bf16_or_None, b_stack_f32, F_pad).
    """
    nlayers = len(params)
    F_pad = _round_up(max(layer_width, size_a), LANE)

    w0, b0 = params[0]
    w0_p = jnp.zeros((size_s, F_pad), jnp.float32).at[:, : w0.shape[1]].set(w0)
    w0_p = w0_p.astype(jnp.bfloat16)

    b_stack = jnp.zeros((nlayers, 1, F_pad), jnp.float32)
    b_stack = b_stack.at[0, 0, : b0.shape[0]].set(b0)

    if nlayers > 1:
        w_stack = jnp.zeros((nlayers - 1, F_pad, F_pad), jnp.float32)
        for i in range(1, nlayers):
            w, b = params[i]
            k, n = w.shape
            w_stack = w_stack.at[i - 1, :k, :n].set(w)
            b_stack = b_stack.at[i, 0, :n].set(b)
        w_stack = w_stack.astype(jnp.bfloat16)
    else:
        w_stack = None

    return w0_p, w_stack, b_stack, F_pad


# ----------------------------------------------------------------------------
# Wrapper: one pallas_call for the whole network, batch tiled over the grid.
# ----------------------------------------------------------------------------
def ddp_forward(packed, x: jax.Array, size_a: int) -> jax.Array:
    w0, w_stack, b_stack, F_pad = packed
    B, K = x.shape
    nlayers = b_stack.shape[0]
    assert K == w0.shape[0], (K, w0.shape)

    # --- batch-tile policy ---------------------------------------------------
    #  * B <= 256 rows  -> single tile (per-grid-step overhead dominates here)
    #  * larger batches -> >= 2 tiles so the "parallel" batch axis shards
    #    across v7x's two TensorCores, capped at 512 rows/tile (tile sweeps
    #    show ~85% of HBM roofline by 512; VMEM cost of a 512-row tile <1 MiB).
    B_pad8 = _round_up(B, SUBLANE)
    if B_pad8 <= 256:
        TB = B_pad8
    else:
        TB = min(_round_up(pl.cdiv(B_pad8, 2), SUBLANE), 512)
    grid = (pl.cdiv(B, TB),)

    # x is passed UNPADDED (no extra HBM zero-pad pass).  Block (TB, K) with
    # K == full last dim is legal; rows of a boundary block past B are garbage
    # on read but row-independent, masked on store, and sliced away below.
    in_specs = [pl.BlockSpec((TB, K), lambda i: (i, 0))]
    args = [x]

    # Constant index maps -> weights/biases stay VMEM-resident across tiles.
    # (Resident bf16 footprint here ~0.05 MiB; if layer_width ever reaches
    #  >=1024, revisit the default double-buffering / vmem_limit_bytes.)
    in_specs.append(pl.BlockSpec(w0.shape, lambda i: (0, 0)))
    args.append(w0)
    if w_stack is not None:
        in_specs.append(pl.BlockSpec(w_stack.shape, lambda i: (0, 0, 0)))
        args.append(w_stack)
    in_specs.append(pl.BlockSpec(b_stack.shape, lambda i: (0, 0, 0)))
    args.append(b_stack)

    kernel = functools.partial(_fused_mlp_kernel, nlayers=nlayers)
    out = pl.pallas_call(
        kernel,
        out_shape=jax.ShapeDtypeStruct((B, F_pad), jnp.float32),
        grid=grid,
        in_specs=in_specs,
        # Lane-dense (128-wide) output block.  Note: for very large, HBM-bound
        # batches an output block of (TB, size_a) would cut writeback 16x at
        # the cost of masked stores -- keep the dense layout for small B.
        out_specs=pl.BlockSpec((TB, F_pad), lambda i: (i, 0)),
        compiler_params=pltpu.CompilerParams(
            dimension_semantics=("parallel",),
        ),
    )(*args)

    # Only the first size_a lanes are real; padded lanes are exact zeros.
    return out[:, :size_a]


# ----------------------------------------------------------------------------
# Pure-JAX reference (original un-padded f32 params) for a sanity check.
# ----------------------------------------------------------------------------
def ddp_reference(params, x: jax.Array) -> jax.Array:
    nlayers = len(params)
    for i, (w, b) in enumerate(params):
        x = x @ w + b
        x = jnp.tanh(x) if i == nlayers - 1 else jnp.maximum(x, 0.0)
    return x


if __name__ == "__main__":
    # Small shapes consistent with the module:
    #   size_s=32 (state dim), size_a=8 (action dim), nlayers=3, layer_width=32
    size_s, size_a, nlayers, layer_width = 32, 8, 3, 32
    batch = 2

    key = jax.random.PRNGKey(0)
    key, kx = jax.random.split(key)
    params = init_ddp_params(key, size_s, size_a, nlayers, layer_width)
    packed = prepare_packed_params(params, size_s, size_a, layer_width)
    x = jax.random.normal(kx, (batch, size_s), dtype=jnp.float32)

    out = ddp_forward(packed, x, size_a)
    out = jax.block_until_ready(out)

    ref = ddp_reference(params, x)
    assert out.shape == (batch, size_a), out.shape
    # bf16 MXU inputs vs. pure-f32 reference -> looser tolerance.
    err = float(jnp.max(jnp.abs(out - ref)))
    assert jnp.allclose(out, ref, atol=2e-2, rtol=2e-2), f"mismatch, max abs err={err}"

    print("KERNEL_OK")
</pallas_src>

<mosaic_0001>
module attributes {stable_mosaic.version = 11 : i64} {
  func.func @_fused_mlp_kernel(%arg0: i32, %arg1: memref<8x32xf32, #tpu.memory_space<vmem>>, %arg2: memref<32x128xbf16, #tpu.memory_space<vmem>>, %arg3: memref<2x128x128xbf16, #tpu.memory_space<vmem>>, %arg4: memref<3x1x128xf32, #tpu.memory_space<vmem>>, %arg5: memref<8x128xf32, #tpu.memory_space<vmem>>) attributes {dimension_semantics = [#tpu.dimension_semantics<parallel>], iteration_bounds = array<i64: 1>, scalar_prefetch = 0 : i64, scratch_operands = 0 : i64, tpu.core_type = #tpu.core_type<tc>, window_params = [{transform_indices = @transform_0, window_bounds = array<i64: 8, 32>}, {pipeline_mode = #tpu.pipeline_mode<synchronous>, transform_indices = @transform_1, window_bounds = array<i64: 32, 128>}, {pipeline_mode = #tpu.pipeline_mode<synchronous>, transform_indices = @transform_2, window_bounds = array<i64: 2, 128, 128>}, {pipeline_mode = #tpu.pipeline_mode<synchronous>, transform_indices = @transform_3, window_bounds = array<i64: 3, 1, 128>}, {transform_indices = @transform_4, window_bounds = array<i64: 8, 128>}]} {
    %c0 = arith.constant 0 : index
    %c0_0 = arith.constant 0 : index
    %0 = vector.load %arg1[%c0, %c0_0] : memref<8x32xf32, #tpu.memory_space<vmem>>, vector<8x32xf32>
    %c0_1 = arith.constant 0 : index
    %c0_2 = arith.constant 0 : index
    %1 = vector.load %arg2[%c0_1, %c0_2] : memref<32x128xbf16, #tpu.memory_space<vmem>>, vector<32x128xbf16>
    %2 = arith.truncf %0 : vector<8x32xf32> to vector<8x32xbf16>
    %cst = arith.constant dense<0.000000e+00> : vector<8x128xf32>
    %3 = tpu.matmul %2, %1, %cst {dimension_numbers = #tpu.dot_dimension_numbers<[1], [0], [0], [1], [0, 0, 1, 1], [], []>} : vector<8x32xbf16>, vector<32x128xbf16>, vector<8x128xf32> -> vector<8x128xf32>
    %c0_3 = arith.constant 0 : index
    %c0_4 = arith.constant 0 : index
    %c0_5 = arith.constant 0 : index
    %4 = vector.load %arg4[%c0_3, %c0_4, %c0_5] : memref<3x1x128xf32, #tpu.memory_space<vmem>>, vector<1x1x128xf32>
    %5 = vector.shape_cast %4 : vector<1x1x128xf32> to vector<1x128xf32>
    %6 = vector.broadcast %5 : vector<1x128xf32> to vector<8x128xf32>
    %7 = arith.addf %3, %6 : vector<8x128xf32>
    %cst_6 = arith.constant 0.000000e+00 : f32
    %8 = vector.broadcast %cst_6 : f32 to vector<8x128xf32>
    %9 = arith.maximumf %7, %8 : vector<8x128xf32>
    %c0_7 = arith.constant 0 : index
    %c0_8 = arith.constant 0 : index
    %c0_9 = arith.constant 0 : index
    %10 = vector.load %arg3[%c0_7, %c0_8, %c0_9] : memref<2x128x128xbf16, #tpu.memory_space<vmem>>, vector<1x128x128xbf16>
    %11 = vector.shape_cast %10 : vector<1x128x128xbf16> to vector<128x128xbf16>
    %12 = arith.truncf %9 : vector<8x128xf32> to vector<8x128xbf16>
    %cst_10 = arith.constant dense<0.000000e+00> : vector<8x128xf32>
    %13 = tpu.matmul %12, %11, %cst_10 {dimension_numbers = #tpu.dot_dimension_numbers<[1], [0], [0], [1], [0, 0, 1, 1], [], []>} : vector<8x128xbf16>, vector<128x128xbf16>, vector<8x128xf32> -> vector<8x128xf32>
    %c1 = arith.constant 1 : index
    %c0_11 = arith.constant 0 : index
    %c0_12 = arith.constant 0 : index
    %14 = vector.load %arg4[%c1, %c0_11, %c0_12] : memref<3x1x128xf32, #tpu.memory_space<vmem>>, vector<1x1x128xf32>
    %15 = vector.shape_cast %14 : vector<1x1x128xf32> to vector<1x128xf32>
    %16 = vector.broadcast %15 : vector<1x128xf32> to vector<8x128xf32>
    %17 = arith.addf %13, %16 : vector<8x128xf32>
    %cst_13 = arith.constant 0.000000e+00 : f32
    %18 = vector.broadcast %cst_13 : f32 to vector<8x128xf32>
    %19 = arith.maximumf %17, %18 : vector<8x128xf32>
    %c1_14 = arith.constant 1 : index
    %c0_15 = arith.constant 0 : index
    %c0_16 = arith.constant 0 : index
    %20 = vector.load %arg3[%c1_14, %c0_15, %c0_16] : memref<2x128x128xbf16, #tpu.memory_space<vmem>>, vector<1x128x128xbf16>
    %21 = vector.shape_cast %20 : vector<1x128x128xbf16> to vector<128x128xbf16>
    %22 = arith.truncf %19 : vector<8x128xf32> to vector<8x128xbf16>
    %cst_17 = arith.constant dense<0.000000e+00> : vector<8x128xf32>
    %23 = tpu.matmul %22, %21, %cst_17 {dimension_numbers = #tpu.dot_dimension_numbers<[1], [0], [0], [1], [0, 0, 1, 1], [], []>} : vector<8x128xbf16>, vector<128x128xbf16>, vector<8x128xf32> -> vector<8x128xf32>
    %c2 = arith.constant 2 : index
    %c0_18 = arith.constant 0 : index
    %c0_19 = arith.constant 0 : index
    %24 = vector.load %arg4[%c2, %c0_18, %c0_19] : memref<3x1x128xf32, #tpu.memory_space<vmem>>, vector<1x1x128xf32>
    %25 = vector.shape_cast %24 : vector<1x1x128xf32> to vector<1x128xf32>
    %26 = vector.broadcast %25 : vector<1x128xf32> to vector<8x128xf32>
    %27 = arith.addf %23, %26 : vector<8x128xf32>
    %28 = math.tanh %27 : vector<8x128xf32>
    %c0_20 = arith.constant 0 : index
    %c0_21 = arith.constant 0 : index
    %29 = vector.load %arg5[%c0_20, %c0_21] : memref<8x128xf32, #tpu.memory_space<vmem>>, vector<8x128xf32>
    tpu.vector_store %arg5[%c0_20, %c0_21], %28 {strides = array<i32>} : memref<8x128xf32, #tpu.memory_space<vmem>>, vector<8x128xf32>,
    return
  }
  func.func @transform_0(%arg0: i32) -> (i32, i32) {
    %c0_i32 = arith.constant 0 : i32
    %c0_i32_0 = arith.constant 0 : i32
    return %arg0, %c0_i32 : i32, i32
  }
  func.func @transform_1(%arg0: i32) -> (i32, i32) {
    %c0_i32 = arith.constant 0 : i32
    %c0_i32_0 = arith.constant 0 : i32
    %c0_i32_1 = arith.constant 0 : i32
    return %c0_i32, %c0_i32_0 : i32, i32
  }
  func.func @transform_2(%arg0: i32) -> (i32, i32, i32) {
    %c0_i32 = arith.constant 0 : i32
    %c0_i32_0 = arith.constant 0 : i32
    %c0_i32_1 = arith.constant 0 : i32
    %c0_i32_2 = arith.constant 0 : i32
    return %c0_i32, %c0_i32_0, %c0_i32_1 : i32, i32, i32
  }
  func.func @transform_3(%arg0: i32) -> (i32, i32, i32) {
    %c0_i32 = arith.constant 0 : i32
    %c0_i32_0 = arith.constant 0 : i32
    %c0_i32_1 = arith.constant 0 : i32
    %c0_i32_2 = arith.constant 0 : i32
    return %c0_i32, %c0_i32_0, %c0_i32_1 : i32, i32, i32
  }
  func.func @transform_4(%arg0: i32) -> (i32, i32) {
    %c0_i32 = arith.constant 0 : i32
    %c0_i32_0 = arith.constant 0 : i32
    return %arg0, %c0_i32 : i32, i32
  }
}

</mosaic_0001>

<llo_original>
// kernel: tpu_custom_call.1
$region0: #{tpu_custom_call.1}
  #allocation0 [shape = 'u32[]', space=smem, size = 0x4, offset = 0x4, fixed_abs, tag = 'smem constant byte address 0x4 - core index']
  #allocation1 [shape = 'u32[144,128]{1,0:T(1,128)}', space=vmem, size = 0x12000, scoped, tag = 'internal scratch']
  %s0 = inlined_call_operand.hbm [shape: f32[2,32], index: 0, kind: input, shape index: {}]
  %s1 = inlined_call_operand.hbm [shape: bf16[32,128], index: 1, kind: input, shape index: {}]
  %s2 = inlined_call_operand.hbm [shape: bf16[2,128,128], index: 2, kind: input, shape index: {}]
  %s3 = inlined_call_operand.vmem [shape: f32[3,1,128], index: 3, kind: input, shape index: {}]
  %s4 = inlined_call_operand.hbm [shape: f32[2,128], index: 4, kind: output, shape index: {}]
  %s5 = sld [smem:[#allocation0]]
  $region38: #{tpu_custom_call.1} parent=0
    _
  %s7 = ssub.s32 1, %s5
  %s8 = scalar_select 0, %s7, %s5
  $region1: #{tpu_custom_call.1} parent=0
    #allocation2 [shape = 'u8[4096]{0}', space=vmem, size = 0x1000, scoped, tag = 'input window, operand 0, single buffered']
    #allocation3 [shape = 's32[1]{0}', space=sflag, size = 0x4, scoped, tag = 'scoped memory for tpu_custom_call.1']
    #allocation4 [shape = 's32[1]{0}', space=sflag, size = 0x4, scoped, tag = 'scoped memory for tpu_custom_call.1']
    #allocation5 [shape = 'u8[8192]{0}', space=vmem, size = 0x2000, scoped, tag = 'input window, operand 1, single buffered']
    #allocation6 [shape = 's32[1]{0}', space=sflag, size = 0x4, scoped, tag = 'scoped memory for tpu_custom_call.1']
    #allocation7 [shape = 'u8[65536]{0}', space=vmem, size = 0x10000, scoped, tag = 'input window, operand 2, single buffered']
    #allocation8 [shape = 'u8[4096]{0}', space=vmem, size = 0x1000, scoped, tag = 'output window, operand 0, single buffered']
    %9 = vsyncpa [#allocation3], 0
    %10 = vsyncpa [#allocation6], 0
    %11 = vsyncpa [#allocation4], 0
    // Predicated region
    $region2: #{tpu_custom_call.1} parent=1 // pred_check
      _
    $region3: #{tpu_custom_call.1} parent=1 // pred_check_branch
      %13 = sbr.rel (0) target = $region5
    $region4: #{tpu_custom_call.1} parent=1 // pred_region
      %s15 = ssub.s32 128, 32
      %16 = vsyncadd [#allocation3], %s15
      %s17 = sshll.u32 [#allocation2], 4
      %s18 = int_to_ptr.vmem [resolvable:$true] %s17
      %23 = dma.hbm_to_vmem [thread:$0]  %s0, 32, %s18, [#allocation3], 32, 32, 2
    $region5: #{tpu_custom_call.1} parent=1 // pred_fallthru
      _
    // Predicated region
    $region6: #{tpu_custom_call.1} parent=1 // pred_check
      _
    $region7: #{tpu_custom_call.1} parent=1 // pred_check_branch
      %25 = sbr.rel (0) target = $region9
    $region8: #{tpu_custom_call.1} parent=1 // pred_region
      %s27 = ssub.s32 256, 256
      %28 = vsyncadd [#allocation6], %s27
      %s29 = sshll.u32 [#allocation5], 4
      %s30 = int_to_ptr.vmem [resolvable:$true] %s29
      %35 = dma.hbm_to_vmem [thread:$0]  %s1, 256, %s30, [#allocation6], 64, 64, 4
    $region9: #{tpu_custom_call.1} parent=1 // pred_fallthru
      _
    // Predicated region
    $region10: #{tpu_custom_call.1} parent=1 // pred_check
      _
    $region11: #{tpu_custom_call.1} parent=1 // pred_check_branch
      %37 = sbr.rel (0) target = $region13
    $region12: #{tpu_custom_call.1} parent=1 // pred_region
      %s39 = ssub.s32 2048, 2048
      %40 = vsyncadd [#allocation6], %s39
      %s41 = sshll.u32 [#allocation7], 4
      %s42 = int_to_ptr.vmem [resolvable:$true] %s41
      %47 = dma.hbm_to_vmem [thread:$0]  %s2, 2048, %s42, [#allocation6], 64, 64, 4
    $region13: #{tpu_custom_call.1} parent=1 // pred_fallthru
      _
    // Predicated region
    $region14: #{tpu_custom_call.1} parent=1 // pred_check
      _
    $region15: #{tpu_custom_call.1} parent=1 // pred_check_branch
      %49 = sbr.rel (0) target = $region17
    $region16: #{tpu_custom_call.1} parent=1 // pred_region
      _
    $region17: #{tpu_custom_call.1} parent=1 // pred_fallthru
      _
    // Predicated region
    $region18: #{tpu_custom_call.1} parent=1 // pred_check
      _
    $region19: #{tpu_custom_call.1} parent=1 // pred_check_branch
      %51 = sbr.rel (0) target = $region21
    $region20: #{tpu_custom_call.1} parent=1 // pred_region
      %52 = dma.done [#allocation3], 128
    $region21: #{tpu_custom_call.1} parent=1 // pred_fallthru
      _
    // Predicated region
    $region22: #{tpu_custom_call.1} parent=1 // pred_check
      _
    $region23: #{tpu_custom_call.1} parent=1 // pred_check_branch
      %54 = sbr.rel (0) target = $region25
    $region24: #{tpu_custom_call.1} parent=1 // pred_region
      %55 = dma.done [#allocation6], 256
    $region25: #{tpu_custom_call.1} parent=1 // pred_fallthru
      _
    // Predicated region
    $region26: #{tpu_custom_call.1} parent=1 // pred_check
      _
    $region27: #{tpu_custom_call.1} parent=1 // pred_check_branch
      %57 = sbr.rel (0) target = $region29
    $region28: #{tpu_custom_call.1} parent=1 // pred_region
      %58 = dma.done [#allocation6], 2048
    $region29: #{tpu_custom_call.1} parent=1 // pred_fallthru
      _
    %v60 = vld [vmem:[#allocation2] sm:$0xff]
    %v61 = vld [vmem:[#allocation5] sm:$0xf]
    %v62 = vld [vmem:[#allocation5 + $0x4] sm:$0xf]
    %v63 = vld [vmem:[#allocation5 + $0x8] sm:$0xf]
    %v64 = vld [vmem:[#allocation5 + $0xc] sm:$0xf]
    %v65 = vpack.c.bf16 %v60, %v60
    %v66 = vld [vmem:[%s3] sm:$0x1]
    %v68 = vlaneseq
    %v69 = vshrl.u32 %v68, 7
    %v70 = vsub.s32 0, %v69
    %v71 = vrot.slane %v66, %v70
    %v77 = vunpack.c.l.b16 %v61
    %v78 = vunpack.c.l.b16 %v62
    %v79 = vunpack.c.l.b16 %v63
    %v80 = vunpack.c.l.b16 %v64
    %v81 = vpack.c.b16 %v78, %v77
    %v82 = vpack.c.b16 %v80, %v79
    %vm85 = vcmask 261120
    %v87 = vsel %vm85, %v65, 0
    %89 = vmatprep.subr.bf16.mxu0 0
    %90 = vmatpush1.bf16.msra.mxu0 0
    %91 = vmatprep.subr.bf16.mxu0 0
    %92 = vmatpush1.bf16.msra.mxu0 0
    %93 = vmatprep.subr.bf16.mxu0 0
    %94 = vmatpush1.bf16.msra.mxu0 0
    %95 = vmatprep.subr.bf16.mxu0 0
    %96 = vmatpush1.bf16.msra.mxu0 0
    %97 = vmatprep.subr.bf16.mxu0 0
    %98 = vmatpush1.bf16.msra.mxu0 0
    %99 = vmatprep.subr.bf16.mxu0 0
    %100 = vmatpush1.bf16.msra.mxu0 0
    %101 = vmatprep.subr.bf16.mxu0 0
    %102 = vmatpush1.bf16.msra.mxu0 %v82
    %103 = vmatprep.subr.bf16.mxu0 0
    %104 = vmatpush1.bf16.msra.mxu0 %v81
    %105 = vmatprep.subr.bf16.mxu0 0
    %106 = vmatpush2.bf16.msra.mxu0 0
    %107 = vmatprep.subr.bf16.mxu0 0
    %108 = vmatpush2.bf16.msra.mxu0 0
    %109 = vmatprep.subr.bf16.mxu0 0
    %110 = vmatpush2.bf16.msra.mxu0 0
    %111 = vmatprep.subr.bf16.mxu0 0
    %112 = vmatpush2.bf16.msra.mxu0 0
    %113 = vmatprep.subr.bf16.mxu0 0
    %114 = vmatpush2.bf16.msra.mxu0 0
    %115 = vmatprep.subr.bf16.mxu0 0
    %116 = vmatpush2.bf16.msra.mxu0 0
    %117 = vmatprep.subr.bf16.mxu0 0
    %118 = vmatpush2.bf16.msra.mxu0 0
    %119 = vmatprep.subr.bf16.mxu0 0
    %120 = vmatpush2.bf16.msra.mxu0 0
    %121 = vmatprep.mubr.bf16.mxu0 0
    %122 = vmatmul.mubr.bf16.gmra.mxu0 %v87
    %v123 = vpop.f32.mrf.mxu0
    %v124 = vadd.f32 %v71, %v123
    %v125 = vpop.f32.mrf.mxu0
    %v126 = vpop.f32.mrf.mxu0
    %v127 = vpop.f32.mrf.mxu0
    %128 = vdwg.mxu0
    %v129 = vmax.f32 %v124, 0.0
    %v130 = vld [vmem:[#allocation7] sm:$0xf]
    %v131 = vld [vmem:[#allocation7 + $0x4] sm:$0xf]
    %v132 = vld [vmem:[#allocation7 + $0x8] sm:$0xf]
    %v133 = vld [vmem:[#allocation7 + $0xc] sm:$0xf]
    %v134 = vld [vmem:[#allocation7 + $0x10] sm:$0xf]
    %v135 = vld [vmem:[#allocation7 + $0x14] sm:$0xf]
    %v136 = vld [vmem:[#allocation7 + $0x18] sm:$0xf]
    %v137 = vld [vmem:[#allocation7 + $0x1c] sm:$0xf]
    %v138 = vld [vmem:[#allocation7 + $0x20] sm:$0xf]
    %v139 = vld [vmem:[#allocation7 + $0x24] sm:$0xf]
    %v140 = vld [vmem:[#allocation7 + $0x28] sm:$0xf]
    %v141 = vld [vmem:[#allocation7 + $0x2c] sm:$0xf]
    %v142 = vld [vmem:[#allocation7 + $0x30] sm:$0xf]
    %v143 = vld [vmem:[#allocation7 + $0x34] sm:$0xf]
    %v144 = vld [vmem:[#allocation7 + $0x38] sm:$0xf]
    %v145 = vld [vmem:[#allocation7 + $0x3c] sm:$0xf]
    %v146 = vpack.c.bf16 %v129, %v129
    %s147 = scalar_lea.vmem %s3, 1
    %v148 = vld [vmem:[%s147] sm:$0x1]
    %v150 = vlaneseq
    %v151 = vshrl.u32 %v150, 7
    %v152 = vsub.s32 0, %v151
    %v153 = vrot.slane %v148, %v152
    %v171 = vunpack.c.l.b16 %v130
    %v172 = vunpack.c.l.b16 %v131
    %v173 = vunpack.c.l.b16 %v132
    %v174 = vunpack.c.l.b16 %v133
    %v175 = vunpack.c.l.b16 %v134
    %v176 = vunpack.c.l.b16 %v135
    %v177 = vunpack.c.l.b16 %v136
    %v178 = vunpack.c.l.b16 %v137
    %v179 = vunpack.c.l.b16 %v138
    %v180 = vunpack.c.l.b16 %v139
    %v181 = vunpack.c.l.b16 %v140
    %v182 = vunpack.c.l.b16 %v141
    %v183 = vunpack.c.l.b16 %v142
    %v184 = vunpack.c.l.b16 %v143
    %v185 = vunpack.c.l.b16 %v144
    %v186 = vunpack.c.l.b16 %v145
    %v187 = vpack.c.b16 %v172, %v171
    %v188 = vpack.c.b16 %v174, %v173
    %v189 = vpack.c.b16 %v176, %v175
    %v190 = vpack.c.b16 %v178, %v177
    %v191 = vpack.c.b16 %v180, %v179
    %v192 = vpack.c.b16 %v182, %v181
    %v193 = vpack.c.b16 %v184, %v183
    %v194 = vpack.c.b16 %v186, %v185
    %203 = vmatprep.subr.bf16.mxu0 0
    %204 = vmatpush1.bf16.msra.mxu0 %v194
    %205 = vmatprep.subr.bf16.mxu0 0
    %206 = vmatpush1.bf16.msra.mxu0 %v193
    %207 = vmatprep.subr.bf16.mxu0 0
    %208 = vmatpush1.bf16.msra.mxu0 %v192
    %209 = vmatprep.subr.bf16.mxu0 0
    %210 = vmatpush1.bf16.msra.mxu0 %v191
    %211 = vmatprep.subr.bf16.mxu0 0
    %212 = vmatpush1.bf16.msra.mxu0 %v190
    %213 = vmatprep.subr.bf16.mxu0 0
    %214 = vmatpush1.bf16.msra.mxu0 %v189
    %215 = vmatprep.subr.bf16.mxu0 0
    %216 = vmatpush1.bf16.msra.mxu0 %v188
    %217 = vmatprep.subr.bf16.mxu0 0
    %218 = vmatpush1.bf16.msra.mxu0 %v187
    %219 = vmatprep.subr.bf16.mxu0 0
    %220 = vmatpush2.bf16.msra.mxu0 0
    %221 = vmatprep.subr.bf16.mxu0 0
    %222 = vmatpush2.bf16.msra.mxu0 0
    %223 = vmatprep.subr.bf16.mxu0 0
    %224 = vmatpush2.bf16.msra.mxu0 0
    %225 = vmatprep.subr.bf16.mxu0 0
    %226 = vmatpush2.bf16.msra.mxu0 0
    %227 = vmatprep.subr.bf16.mxu0 0
    %228 = vmatpush2.bf16.msra.mxu0 0
    %229 = vmatprep.subr.bf16.mxu0 0
    %230 = vmatpush2.bf16.msra.mxu0 0
    %231 = vmatprep.subr.bf16.mxu0 0
    %232 = vmatpush2.bf16.msra.mxu0 0
    %233 = vmatprep.subr.bf16.mxu0 0
    %234 = vmatpush2.bf16.msra.mxu0 0
    %235 = vmatprep.mubr.bf16.mxu0 0
    %236 = vmatmul.mubr.bf16.gmra.mxu0 %v146
    %v237 = vpop.f32.mrf.mxu0
    %v238 = vadd.f32 %v153, %v237
    %v239 = vpop.f32.mrf.mxu0
    %v240 = vpop.f32.mrf.mxu0
    %v241 = vpop.f32.mrf.mxu0
    %242 = vdwg.mxu0
    %v243 = vmax.f32 %v238, 0.0
    %s244 = scalar_lea.vmem [#allocation7], 64
    %v245 = vld [vmem:[%s244] sm:$0xf]
    %v246 = vld [vmem:[%s244 + $0x4] sm:$0xf]
    %v247 = vld [vmem:[%s244 + $0x8] sm:$0xf]
    %v248 = vld [vmem:[%s244 + $0xc] sm:$0xf]
    %v249 = vld [vmem:[%s244 + $0x10] sm:$0xf]
    %v250 = vld [vmem:[%s244 + $0x14] sm:$0xf]
    %v251 = vld [vmem:[%s244 + $0x18] sm:$0xf]
    %v252 = vld [vmem:[%s244 + $0x1c] sm:$0xf]
    %v253 = vld [vmem:[%s244 + $0x20] sm:$0xf]
    %v254 = vld [vmem:[%s244 + $0x24] sm:$0xf]
    %v255 = vld [vmem:[%s244 + $0x28] sm:$0xf]
    %v256 = vld [vmem:[%s244 + $0x2c] sm:$0xf]
    %v257 = vld [vmem:[%s244 + $0x30] sm:$0xf]
    %v258 = vld [vmem:[%s244 + $0x34] sm:$0xf]
    %v259 = vld [vmem:[%s244 + $0x38] sm:$0xf]
    %v260 = vld [vmem:[%s244 + $0x3c] sm:$0xf]
    %v261 = vpack.c.bf16 %v243, %v243
    %s262 = scalar_lea.vmem %s3, 2
    %v263 = vld [vmem:[%s262] sm:$0x1]
    %v265 = vlaneseq
    %v266 = vshrl.u32 %v265, 7
    %v267 = vsub.s32 0, %v266
    %v268 = vrot.slane %v263, %v267
    %v286 = vunpack.c.l.b16 %v245
    %v287 = vunpack.c.l.b16 %v246
    %v288 = vunpack.c.l.b16 %v247
    %v289 = vunpack.c.l.b16 %v248
    %v290 = vunpack.c.l.b16 %v249
    %v291 = vunpack.c.l.b16 %v250
    %v292 = vunpack.c.l.b16 %v251
    %v293 = vunpack.c.l.b16 %v252
    %v294 = vunpack.c.l.b16 %v253
    %v295 = vunpack.c.l.b16 %v254
    %v296 = vunpack.c.l.b16 %v255
    %v297 = vunpack.c.l.b16 %v256
    %v298 = vunpack.c.l.b16 %v257
    %v299 = vunpack.c.l.b16 %v258
    %v300 = vunpack.c.l.b16 %v259
    %v301 = vunpack.c.l.b16 %v260
    %v302 = vpack.c.b16 %v287, %v286
    %v303 = vpack.c.b16 %v289, %v288
    %v304 = vpack.c.b16 %v291, %v290
    %v305 = vpack.c.b16 %v293, %v292
    %v306 = vpack.c.b16 %v295, %v294
    %v307 = vpack.c.b16 %v297, %v296
    %v308 = vpack.c.b16 %v299, %v298
    %v309 = vpack.c.b16 %v301, %v300
    %318 = vmatprep.subr.bf16.mxu0 0
    %319 = vmatpush1.bf16.msra.mxu0 %v309
    %320 = vmatprep.subr.bf16.mxu0 0
    %321 = vmatpush1.bf16.msra.mxu0 %v308
    %322 = vmatprep.subr.bf16.mxu0 0
    %323 = vmatpush1.bf16.msra.mxu0 %v307
    %324 = vmatprep.subr.bf16.mxu0 0
    %325 = vmatpush1.bf16.msra.mxu0 %v306
    %326 = vmatprep.subr.bf16.mxu0 0
    %327 = vmatpush1.bf16.msra.mxu0 %v305
    %328 = vmatprep.subr.bf16.mxu0 0
    %329 = vmatpush1.bf16.msra.mxu0 %v304
    %330 = vmatprep.subr.bf16.mxu0 0
    %331 = vmatpush1.bf16.msra.mxu0 %v303
    %332 = vmatprep.subr.bf16.mxu0 0
    %333 = vmatpush1.bf16.msra.mxu0 %v302
    %334 = vmatprep.subr.bf16.mxu0 0
    %335 = vmatpush2.bf16.msra.mxu0 0
    %336 = vmatprep.subr.bf16.mxu0 0
    %337 = vmatpush2.bf16.msra.mxu0 0
    %338 = vmatprep.subr.bf16.mxu0 0
    %339 = vmatpush2.bf16.msra.mxu0 0
    %340 = vmatprep.subr.bf16.mxu0 0
    %341 = vmatpush2.bf16.msra.mxu0 0
    %342 = vmatprep.subr.bf16.mxu0 0
    %343 = vmatpush2.bf16.msra.mxu0 0
    %344 = vmatprep.subr.bf16.mxu0 0
    %345 = vmatpush2.bf16.msra.mxu0 0
    %346 = vmatprep.subr.bf16.mxu0 0
    %347 = vmatpush2.bf16.msra.mxu0 0
    %348 = vmatprep.subr.bf16.mxu0 0
    %349 = vmatpush2.bf16.msra.mxu0 0
    %350 = vmatprep.mubr.bf16.mxu0 0
    %351 = vmatmul.mubr.bf16.gmra.mxu0 %v261
    %v352 = vpop.f32.mrf.mxu0
    %v353 = vadd.f32 %v268, %v352
    %v354 = vpop.f32.mrf.mxu0
    %v355 = vpop.f32.mrf.mxu0
    %v356 = vpop.f32.mrf.mxu0
    %357 = vdwg.mxu0
    %v358 = vtanh.pop %v353
    %359 = vst [vmem:[#allocation8] sm:$0xff] %v358
    // Predicated region
    $region30: #{tpu_custom_call.1} parent=1 // pred_check
      _
    $region31: #{tpu_custom_call.1} parent=1 // pred_check_branch
      %361 = sbr.rel (0) target = $region33
    $region32: #{tpu_custom_call.1} parent=1 // pred_region
      %s363 = ssub.s32 128, 32
      %364 = vsyncadd [#allocation4], %s363
      %s365 = sshll.u32 [#allocation8], 4
      %s366 = int_to_ptr.vmem [resolvable:$true] %s365
      %371 = dma.vmem_to_hbm [thread:$0]  %s366, 32, %s4, [#allocation4], 32, 32, 2
    $region33: #{tpu_custom_call.1} parent=1 // pred_fallthru
      _
    // Predicated region
    $region34: #{tpu_custom_call.1} parent=1 // pred_check
      _
    $region35: #{tpu_custom_call.1} parent=1 // pred_check_branch
      %373 = sbr.rel (0) target = $region37
    $region36: #{tpu_custom_call.1} parent=1 // pred_region
      %374 = dma.done [#allocation4], 128
    $region37: #{tpu_custom_call.1} parent=1 // pred_fallthru
      _
    %375 = vsyncpa [#allocation3], 1
    %376 = vsyncpa [#allocation6], 1
    %377 = vsyncpa [#allocation4], 1

</llo_original>
